<compile_context>
chip_gen: v7x
topology: tpu7x:2x2x1
jax: 0.10.0
libtpu: 0.0.40
codegen_flags: <defaults>
</compile_context>

<pallas_src>
import jax
import jax.numpy as jnp
from jax.experimental import pallas as pl
from jax.experimental.pallas import tpu as pltpu


_DEFAULT_BATCH_TILE = 2048   # rows per grid step for big replay-buffer batches
_SPLIT_THRESHOLD = 256       # below this, one grid step; above, >=2 (v7x megacore)


def _round_up(x, m):
    return ((x + m - 1) // m) * m


def _choose_tile(batch, batch_tile):
    """Batch-tile rows: multiple of 8, <= batch_tile, >=2 grid steps when big."""
    b8 = _round_up(max(batch, 1), 8)
    if b8 < _SPLIT_THRESHOLD:
        return b8                                   # tiny batch: single step
    # Split so the 1-D "parallel" grid has at least 2 steps (v7x: 2 TensorCores),
    # capped at batch_tile rows (keeps per-step VMEM ~3 MiB at the default).
    return max(8, min(batch_tile, _round_up(pl.cdiv(b8, 2), 8)))


# ---------------------------------------------------------------------------
# Kernels
# ---------------------------------------------------------------------------

def _q_block(x_ref, w1_ref, b1_ref, w2_ref, b2_ref):
    """(TB, A) f32 q-values for the current batch tile (all math in f32)."""
    h = jnp.dot(x_ref[...], w1_ref[...], preferred_element_type=jnp.float32)
    h = jnp.tanh(h + b1_ref[...])                     # f32 bias add + tanh (VPU/EUP)
    q = jnp.dot(h, w2_ref[...], preferred_element_type=jnp.float32)
    return q + b2_ref[...]


def mlp_kernel(x_ref, w1_ref, b1_ref, w2_ref, b2_ref, q_ref):
    """Forward pass: unpadded (TB, num_actions) f32 q-value output."""
    q_ref[...] = _q_block(x_ref, w1_ref, b1_ref, w2_ref, b2_ref)


def mlp_act_kernel(x_ref, w1_ref, b1_ref, w2_ref, b2_ref, act_ref):
    """Forward pass + fused argmax -> int32 action per row (first-max tiebreak)."""
    q = _q_block(x_ref, w1_ref, b1_ref, w2_ref, b2_ref)          # (TB, A) f32
    lane = jax.lax.broadcasted_iota(jnp.int32, q.shape, 1)       # action index
    mx = jnp.max(q, axis=1, keepdims=True)                       # XLU cross-lane max
    cand = jnp.where(q == mx, lane, jnp.int32(q.shape[1]))       # non-max -> sentinel
    act_ref[...] = jnp.min(cand, axis=1, keepdims=True)          # (TB, 1) int32


# ---------------------------------------------------------------------------
# Wrappers
# ---------------------------------------------------------------------------

def _specs(tb, f, h, a):
    return [
        pl.BlockSpec((tb, f), lambda i: (i, 0)),   # x tile marches with the grid
        # Weights/biases: constant index_map -> fetched once, VMEM-resident
        # across grid steps (Pallas skips re-DMA when the block index repeats).
        pl.BlockSpec((f, h), lambda i: (0, 0)),
        pl.BlockSpec((1, h), lambda i: (0, 0)),
        pl.BlockSpec((h, a), lambda i: (0, 0)),
        pl.BlockSpec((1, a), lambda i: (0, 0)),
    ]


def network_forward(x, params, *, batch_tile=_DEFAULT_BATCH_TILE):
    """x: (B, F) f32; params: (w1, b1, w2, b2) f32. Returns (B, num_actions) f32."""
    w1, b1, w2, b2 = params
    batch, f = x.shape
    h, a = w2.shape
    tb = _choose_tile(batch, batch_tile)
    return pl.pallas_call(
        mlp_kernel,
        out_shape=jax.ShapeDtypeStruct((batch, a), jnp.float32),
        grid=(pl.cdiv(batch, tb),),                   # ragged tail handled by Pallas
        in_specs=_specs(tb, f, h, a),
        out_specs=pl.BlockSpec((tb, a), lambda i: (i, 0)),
        compiler_params=pltpu.CompilerParams(dimension_semantics=("parallel",)),
    )(x, w1, b1, w2, b2)


def network_act(x, params, *, batch_tile=_DEFAULT_BATCH_TILE):
    """Fused forward + argmax. x: (B, F) or (F,) f32 -> (B,) int32 actions."""
    if x.ndim == 1:                                   # mirrors torch act(): unsqueeze(0)
        x = x[None, :]
    w1, b1, w2, b2 = params
    batch, f = x.shape
    h, a = w2.shape
    tb = _choose_tile(batch, batch_tile)
    acts = pl.pallas_call(
        mlp_act_kernel,
        out_shape=jax.ShapeDtypeStruct((batch, 1), jnp.int32),
        grid=(pl.cdiv(batch, tb),),
        in_specs=_specs(tb, f, h, a),
        out_specs=pl.BlockSpec((tb, 1), lambda i: (i, 0)),
        compiler_params=pltpu.CompilerParams(dimension_semantics=("parallel",)),
    )(x, w1, b1, w2, b2)
    return acts[:, 0]


# ---------------------------------------------------------------------------
# Parameter init (PyTorch nn.Linear default: uniform +/- 1/sqrt(fan_in)),
# stored (fan_in, fan_out) so the kernel computes x @ W + b == torch x @ W.T + b.
# ---------------------------------------------------------------------------

def init_params(key, in_features, hidden, num_actions):
    k1, k2, k3, k4 = jax.random.split(key, 4)
    bound1 = 1.0 / jnp.sqrt(in_features)
    bound2 = 1.0 / jnp.sqrt(hidden)
    w1 = jax.random.uniform(k1, (in_features, hidden), jnp.float32, -bound1, bound1)
    b1 = jax.random.uniform(k2, (1, hidden), jnp.float32, -bound1, bound1)
    w2 = jax.random.uniform(k3, (hidden, num_actions), jnp.float32, -bound2, bound2)
    b2 = jax.random.uniform(k4, (1, num_actions), jnp.float32, -bound2, bound2)
    return w1, b1, w2, b2


# ---------------------------------------------------------------------------
# Self-test
# ---------------------------------------------------------------------------

if __name__ == "__main__":
    # Synthetic shapes consistent with the module:
    #   in_features = prod(env.get_state(0).shape) -> flat state of 32
    #   hidden = 64 (fixed by the module); num_actions = len(env.actions) -> 8
    # TODO(synk): the gym environment (state extraction / action set / replay loop)
    # has no Pallas equivalent; shapes are synthetic stand-ins.
    BATCH = 2
    IN_FEATURES = 32
    HIDDEN = 64
    NUM_ACTIONS = 8

    key = jax.random.PRNGKey(0)
    kx, kp, kb = jax.random.split(key, 3)
    x = jax.random.normal(kx, (BATCH, IN_FEATURES), dtype=jnp.float32)

    params = init_params(kp, IN_FEATURES, HIDDEN, NUM_ACTIONS)
    w1, b1, w2, b2 = params

    # --- forward pass (small batch, like act()/target evaluation) ---
    q = network_forward(x, params)
    jax.block_until_ready(q)
    assert q.shape == (BATCH, NUM_ACTIONS)

    # Reference: original f32 module math. Tolerance covers MXU default-precision
    # f32 matmul (bf16-pass) rounding inside/outside the kernel.
    ref = jnp.tanh(x @ w1 + b1) @ w2 + b2
    assert jnp.allclose(q, ref, atol=3e-2, rtol=3e-2), float(jnp.max(jnp.abs(q - ref)))

    # --- act(): fused argmax inside the kernel (single-observation style) ---
    actions = network_act(x, params)
    jax.block_until_ready(actions)
    assert actions.shape == (BATCH,)
    assert jnp.array_equal(actions, jnp.argmax(q, axis=1).astype(jnp.int32))
    action = int(actions[0])
    assert 0 <= action < NUM_ACTIONS

    # --- large (replay-buffer style) batch: exercises the ragged cdiv grid
    #     (no jnp.pad copy) and the >=2-step batch grid (v7x megacore) ---
    x_big = jax.random.normal(kb, (1000, IN_FEATURES), dtype=jnp.float32)
    q_big = network_forward(x_big, params)
    jax.block_until_ready(q_big)
    assert q_big.shape == (1000, NUM_ACTIONS)
    ref_big = jnp.tanh(x_big @ w1 + b1) @ w2 + b2
    assert jnp.allclose(q_big, ref_big, atol=3e-2, rtol=3e-2)

    acts_big = network_act(x_big, params)
    jax.block_until_ready(acts_big)
    assert acts_big.shape == (1000,)
    # Robust check: chosen action attains the row maximum of the kernel q-values.
    rows = jnp.arange(q_big.shape[0])
    assert bool(jnp.all(q_big[rows, acts_big] >= jnp.max(q_big, axis=1) - 1e-5))

    print("KERNEL_OK")
</pallas_src>

<mosaic_0001>
module attributes {stable_mosaic.version = 11 : i64} {
  func.func @mlp_kernel(%arg0: i32, %arg1: memref<8x32xf32, #tpu.memory_space<vmem>>, %arg2: memref<32x64xf32, #tpu.memory_space<vmem>>, %arg3: memref<1x64xf32, #tpu.memory_space<vmem>>, %arg4: memref<64x8xf32, #tpu.memory_space<vmem>>, %arg5: memref<1x8xf32, #tpu.memory_space<vmem>>, %arg6: memref<8x8xf32, #tpu.memory_space<vmem>>) attributes {dimension_semantics = [#tpu.dimension_semantics<parallel>], iteration_bounds = array<i64: 1>, scalar_prefetch = 0 : i64, scratch_operands = 0 : i64, tpu.core_type = #tpu.core_type<tc>, window_params = [{transform_indices = @transform_0, window_bounds = array<i64: 8, 32>}, {pipeline_mode = #tpu.pipeline_mode<synchronous>, transform_indices = @transform_1, window_bounds = array<i64: 32, 64>}, {pipeline_mode = #tpu.pipeline_mode<synchronous>, transform_indices = @transform_2, window_bounds = array<i64: 1, 64>}, {pipeline_mode = #tpu.pipeline_mode<synchronous>, transform_indices = @transform_3, window_bounds = array<i64: 64, 8>}, {pipeline_mode = #tpu.pipeline_mode<synchronous>, transform_indices = @transform_4, window_bounds = array<i64: 1, 8>}, {transform_indices = @transform_5, window_bounds = array<i64: 8, 8>}]} {
    %c0 = arith.constant 0 : index
    %c0_0 = arith.constant 0 : index
    %0 = vector.load %arg1[%c0, %c0_0] : memref<8x32xf32, #tpu.memory_space<vmem>>, vector<8x32xf32>
    %c0_1 = arith.constant 0 : index
    %c0_2 = arith.constant 0 : index
    %1 = vector.load %arg2[%c0_1, %c0_2] : memref<32x64xf32, #tpu.memory_space<vmem>>, vector<32x64xf32>
    %cst = arith.constant dense<0.000000e+00> : vector<8x64xf32>
    %2 = tpu.matmul %0, %1, %cst {dimension_numbers = #tpu.dot_dimension_numbers<[1], [0], [0], [1], [0, 0, 1, 1], [], []>} : vector<8x32xf32>, vector<32x64xf32>, vector<8x64xf32> -> vector<8x64xf32>
    %c0_3 = arith.constant 0 : index
    %c0_4 = arith.constant 0 : index
    %3 = vector.load %arg3[%c0_3, %c0_4] : memref<1x64xf32, #tpu.memory_space<vmem>>, vector<1x64xf32>
    %4 = vector.broadcast %3 : vector<1x64xf32> to vector<8x64xf32>
    %5 = arith.addf %2, %4 : vector<8x64xf32>
    %6 = math.tanh %5 : vector<8x64xf32>
    %c0_5 = arith.constant 0 : index
    %c0_6 = arith.constant 0 : index
    %7 = vector.load %arg4[%c0_5, %c0_6] : memref<64x8xf32, #tpu.memory_space<vmem>>, vector<64x8xf32>
    %cst_7 = arith.constant dense<0.000000e+00> : vector<8x8xf32>
    %8 = tpu.matmul %6, %7, %cst_7 {dimension_numbers = #tpu.dot_dimension_numbers<[1], [0], [0], [1], [0, 0, 1, 1], [], []>} : vector<8x64xf32>, vector<64x8xf32>, vector<8x8xf32> -> vector<8x8xf32>
    %c0_8 = arith.constant 0 : index
    %c0_9 = arith.constant 0 : index
    %9 = vector.load %arg5[%c0_8, %c0_9] : memref<1x8xf32, #tpu.memory_space<vmem>>, vector<1x8xf32>
    %10 = vector.broadcast %9 : vector<1x8xf32> to vector<8x8xf32>
    %11 = arith.addf %8, %10 : vector<8x8xf32>
    %c0_10 = arith.constant 0 : index
    %c0_11 = arith.constant 0 : index
    %12 = vector.load %arg6[%c0_10, %c0_11] : memref<8x8xf32, #tpu.memory_space<vmem>>, vector<8x8xf32>
    tpu.vector_store %arg6[%c0_10, %c0_11], %11 {strides = array<i32>} : memref<8x8xf32, #tpu.memory_space<vmem>>, vector<8x8xf32>,
    return
  }
  func.func @transform_0(%arg0: i32) -> (i32, i32) {
    %c0_i32 = arith.constant 0 : i32
    %c0_i32_0 = arith.constant 0 : i32
    return %arg0, %c0_i32 : i32, i32
  }
  func.func @transform_1(%arg0: i32) -> (i32, i32) {
    %c0_i32 = arith.constant 0 : i32
    %c0_i32_0 = arith.constant 0 : i32
    %c0_i32_1 = arith.constant 0 : i32
    return %c0_i32, %c0_i32_0 : i32, i32
  }
  func.func @transform_2(%arg0: i32) -> (i32, i32) {
    %c0_i32 = arith.constant 0 : i32
    %c0_i32_0 = arith.constant 0 : i32
    %c0_i32_1 = arith.constant 0 : i32
    return %c0_i32, %c0_i32_0 : i32, i32
  }
  func.func @transform_3(%arg0: i32) -> (i32, i32) {
    %c0_i32 = arith.constant 0 : i32
    %c0_i32_0 = arith.constant 0 : i32
    %c0_i32_1 = arith.constant 0 : i32
    return %c0_i32, %c0_i32_0 : i32, i32
  }
  func.func @transform_4(%arg0: i32) -> (i32, i32) {
    %c0_i32 = arith.constant 0 : i32
    %c0_i32_0 = arith.constant 0 : i32
    %c0_i32_1 = arith.constant 0 : i32
    return %c0_i32, %c0_i32_0 : i32, i32
  }
  func.func @transform_5(%arg0: i32) -> (i32, i32) {
    %c0_i32 = arith.constant 0 : i32
    %c0_i32_0 = arith.constant 0 : i32
    return %arg0, %c0_i32 : i32, i32
  }
}

</mosaic_0001>

<llo_original>
// kernel: tpu_custom_call.1
$region0: #{tpu_custom_call.1}
  #allocation0 [shape = 'u32[]', space=smem, size = 0x4, offset = 0x4, fixed_abs, tag = 'smem constant byte address 0x4 - core index']
  #allocation1 [shape = 'u32[144,128]{1,0:T(1,128)}', space=vmem, size = 0x12000, scoped, tag = 'internal scratch']
  %s0 = inlined_call_operand.vmem [shape: f32[2,32], index: 0, kind: input, shape index: {}]
  %s1 = inlined_call_operand.vmem [shape: f32[32,64], index: 1, kind: input, shape index: {}]
  %s2 = inlined_call_operand.vmem [shape: f32[1,64], index: 2, kind: input, shape index: {}]
  %s3 = inlined_call_operand.vmem [shape: f32[64,8], index: 3, kind: input, shape index: {}]
  %s4 = inlined_call_operand.vmem [shape: f32[1,8], index: 4, kind: input, shape index: {}]
  %s5 = inlined_call_operand.hbm [shape: f32[2,8], index: 5, kind: output, shape index: {}]
  %s6 = sld [smem:[#allocation0]]
  $region30: #{tpu_custom_call.1} parent=0
    _
  %s8 = ssub.s32 1, %s6
  %s9 = scalar_select 0, %s8, %s6
  $region1: #{tpu_custom_call.1} parent=0
    #allocation2 [shape = 'u8[4096]{0}', space=vmem, size = 0x1000, scoped, tag = 'output window, operand 0, single buffered']
    #allocation3 [shape = 's32[1]{0}', space=sflag, size = 0x4, scoped, tag = 'scoped memory for tpu_custom_call.1']
    %10 = vsyncpa [#allocation3], 0
    // Predicated region
    $region2: #{tpu_custom_call.1} parent=1 // pred_check
      _
    $region3: #{tpu_custom_call.1} parent=1 // pred_check_branch
      %12 = sbr.rel (0) target = $region5
    $region4: #{tpu_custom_call.1} parent=1 // pred_region
      _
    $region5: #{tpu_custom_call.1} parent=1 // pred_fallthru
      _
    // Predicated region
    $region6: #{tpu_custom_call.1} parent=1 // pred_check
      _
    $region7: #{tpu_custom_call.1} parent=1 // pred_check_branch
      %14 = sbr.rel (0) target = $region9
    $region8: #{tpu_custom_call.1} parent=1 // pred_region
      _
    $region9: #{tpu_custom_call.1} parent=1 // pred_fallthru
      _
    // Predicated region
    $region10: #{tpu_custom_call.1} parent=1 // pred_check
      _
    $region11: #{tpu_custom_call.1} parent=1 // pred_check_branch
      %16 = sbr.rel (0) target = $region13
    $region12: #{tpu_custom_call.1} parent=1 // pred_region
      _
    $region13: #{tpu_custom_call.1} parent=1 // pred_fallthru
      _
    // Predicated region
    $region14: #{tpu_custom_call.1} parent=1 // pred_check
      _
    $region15: #{tpu_custom_call.1} parent=1 // pred_check_branch
      %18 = sbr.rel (0) target = $region17
    $region16: #{tpu_custom_call.1} parent=1 // pred_region
      _
    $region17: #{tpu_custom_call.1} parent=1 // pred_fallthru
      _
    // Predicated region
    $region18: #{tpu_custom_call.1} parent=1 // pred_check
      _
    $region19: #{tpu_custom_call.1} parent=1 // pred_check_branch
      %20 = sbr.rel (0) target = $region21
    $region20: #{tpu_custom_call.1} parent=1 // pred_region
      _
    $region21: #{tpu_custom_call.1} parent=1 // pred_fallthru
      _
    %v21 = vld [vmem:[%s0] sm:$0xff]
    %v22 = vld [vmem:[%s1] sm:$0xff]
    %v23 = vld [vmem:[%s1 + $0x8] sm:$0xff]
    %v24 = vld [vmem:[%s1 + $0x10] sm:$0xff]
    %v25 = vld [vmem:[%s1 + $0x18] sm:$0xff]
    %v26 = vld [vmem:[%s2] sm:$0x1]
    %v28 = vlaneseq
    %v29 = vshrl.u32 %v28, 7
    %v30 = vsub.s32 0, %v29
    %v31 = vrot.slane %v26, %v30
    %vm33 = vcmask 261120
    %v35 = vsel %vm33, %v21, 0
    %37 = vmatprep.subr.mxu0 0.0
    %38 = vmatpush1.msra.mxu0 %v22
    %39 = vmatprep.subr.mxu0 0.0
    %40 = vmatpush1.msra.mxu0 %v23
    %41 = vmatprep.subr.mxu0 0.0
    %42 = vmatpush1.msra.mxu0 %v24
    %43 = vmatprep.subr.mxu0 0.0
    %44 = vmatpush1.msra.mxu0 %v25
    %45 = vmatprep.subr.mxu0 0.0
    %46 = vmatpush1.msra.mxu0 0.0
    %47 = vmatprep.subr.mxu0 0.0
    %48 = vmatpush1.msra.mxu0 0.0
    %49 = vmatprep.subr.mxu0 0.0
    %50 = vmatpush1.msra.mxu0 0.0
    %51 = vmatprep.subr.mxu0 0.0
    %52 = vmatpush1.msra.mxu0 0.0
    %53 = vmatprep.subr.mxu0 0.0
    %54 = vmatpush1.msra.mxu0 0.0
    %55 = vmatprep.subr.mxu0 0.0
    %56 = vmatpush1.msra.mxu0 0.0
    %57 = vmatprep.subr.mxu0 0.0
    %58 = vmatpush1.msra.mxu0 0.0
    %59 = vmatprep.subr.mxu0 0.0
    %60 = vmatpush1.msra.mxu0 0.0
    %61 = vmatprep.subr.mxu0 0.0
    %62 = vmatpush1.msra.mxu0 0.0
    %63 = vmatprep.subr.mxu0 0.0
    %64 = vmatpush1.msra.mxu0 0.0
    %65 = vmatprep.subr.mxu0 0.0
    %66 = vmatpush1.msra.mxu0 0.0
    %67 = vmatprep.subr.mxu0 0.0
    %68 = vmatpush1.msra.mxu0 0.0
    %69 = vmatprep.subr.mxu0 0.0
    %70 = vmatpush1.msra.mxu0 0.0
    %71 = vmatprep.subr.mxu0 0.0
    %72 = vmatpush1.msra.mxu0 0.0
    %73 = vmatprep.subr.mxu0 0.0
    %74 = vmatpush1.msra.mxu0 0.0
    %75 = vmatprep.subr.mxu0 0.0
    %76 = vmatpush1.msra.mxu0 0.0
    %77 = vmatprep.subr.mxu0 0.0
    %78 = vmatpush1.msra.mxu0 0.0
    %79 = vmatprep.subr.mxu0 0.0
    %80 = vmatpush1.msra.mxu0 0.0
    %81 = vmatprep.subr.mxu0 0.0
    %82 = vmatpush1.msra.mxu0 0.0
    %83 = vmatprep.subr.mxu0 0.0
    %84 = vmatpush1.msra.mxu0 0.0
    %85 = vmatprep.subr.mxu0 0.0
    %86 = vmatpush1.msra.mxu0 0.0
    %87 = vmatprep.subr.mxu0 0.0
    %88 = vmatpush1.msra.mxu0 0.0
    %89 = vmatprep.subr.mxu0 0.0
    %90 = vmatpush1.msra.mxu0 0.0
    %91 = vmatprep.subr.mxu0 0.0
    %92 = vmatpush1.msra.mxu0 0.0
    %93 = vmatprep.subr.mxu0 0.0
    %94 = vmatpush1.msra.mxu0 0.0
    %95 = vmatprep.subr.mxu0 0.0
    %96 = vmatpush1.msra.mxu0 0.0
    %97 = vmatprep.subr.mxu0 0.0
    %98 = vmatpush1.msra.mxu0 0.0
    %99 = vmatprep.subr.mxu0 0.0
    %100 = vmatpush1.msra.mxu0 0.0
    %101 = vmatprep.mubr.f32.mxu0 0.0
    %102 = vmatmul.mubr.f32.gmra.mrb[0].mxu0 %v35
    %v103 = vpop.f32.mrb[0].mxu0
    %v104 = vadd.f32 %v31, %v103
    %v105 = vpop.f32.mrb[0].mxu0
    %106 = vdwg.mxu0
    %v107 = vtanh.pop %v104
    %v108 = vld [vmem:[%s3] sm:$0xff]
    %v109 = vld [vmem:[%s3 + $0x8] sm:$0xff]
    %v110 = vld [vmem:[%s3 + $0x10] sm:$0xff]
    %v111 = vld [vmem:[%s3 + $0x18] sm:$0xff]
    %v112 = vld [vmem:[%s3 + $0x20] sm:$0xff]
    %v113 = vld [vmem:[%s3 + $0x28] sm:$0xff]
    %v114 = vld [vmem:[%s3 + $0x30] sm:$0xff]
    %v115 = vld [vmem:[%s3 + $0x38] sm:$0xff]
    %v116 = vld [vmem:[%s4] sm:$0x1]
    %v118 = vlaneseq
    %v119 = vshrl.u32 %v118, 7
    %v120 = vsub.s32 0, %v119
    %v121 = vrot.slane %v116, %v120
    %vm123 = vcmask 523264
    %v125 = vsel %vm123, %v107, 0
    %127 = vmatprep.subr.mxu0 0.0
    %128 = vmatpush1.msra.mxu0 %v108
    %129 = vmatprep.subr.mxu0 0.0
    %130 = vmatpush1.msra.mxu0 %v109
    %131 = vmatprep.subr.mxu0 0.0
    %132 = vmatpush1.msra.mxu0 %v110
    %133 = vmatprep.subr.mxu0 0.0
    %134 = vmatpush1.msra.mxu0 %v111
    %135 = vmatprep.subr.mxu0 0.0
    %136 = vmatpush1.msra.mxu0 %v112
    %137 = vmatprep.subr.mxu0 0.0
    %138 = vmatpush1.msra.mxu0 %v113
    %139 = vmatprep.subr.mxu0 0.0
    %140 = vmatpush1.msra.mxu0 %v114
    %141 = vmatprep.subr.mxu0 0.0
    %142 = vmatpush1.msra.mxu0 %v115
    %143 = vmatprep.subr.mxu0 0.0
    %144 = vmatpush1.msra.mxu0 0.0
    %145 = vmatprep.subr.mxu0 0.0
    %146 = vmatpush1.msra.mxu0 0.0
    %147 = vmatprep.subr.mxu0 0.0
    %148 = vmatpush1.msra.mxu0 0.0
    %149 = vmatprep.subr.mxu0 0.0
    %150 = vmatpush1.msra.mxu0 0.0
    %151 = vmatprep.subr.mxu0 0.0
    %152 = vmatpush1.msra.mxu0 0.0
    %153 = vmatprep.subr.mxu0 0.0
    %154 = vmatpush1.msra.mxu0 0.0
    %155 = vmatprep.subr.mxu0 0.0
    %156 = vmatpush1.msra.mxu0 0.0
    %157 = vmatprep.subr.mxu0 0.0
    %158 = vmatpush1.msra.mxu0 0.0
    %159 = vmatprep.subr.mxu0 0.0
    %160 = vmatpush1.msra.mxu0 0.0
    %161 = vmatprep.subr.mxu0 0.0
    %162 = vmatpush1.msra.mxu0 0.0
    %163 = vmatprep.subr.mxu0 0.0
    %164 = vmatpush1.msra.mxu0 0.0
    %165 = vmatprep.subr.mxu0 0.0
    %166 = vmatpush1.msra.mxu0 0.0
    %167 = vmatprep.subr.mxu0 0.0
    %168 = vmatpush1.msra.mxu0 0.0
    %169 = vmatprep.subr.mxu0 0.0
    %170 = vmatpush1.msra.mxu0 0.0
    %171 = vmatprep.subr.mxu0 0.0
    %172 = vmatpush1.msra.mxu0 0.0
    %173 = vmatprep.subr.mxu0 0.0
    %174 = vmatpush1.msra.mxu0 0.0
    %175 = vmatprep.subr.mxu0 0.0
    %176 = vmatpush1.msra.mxu0 0.0
    %177 = vmatprep.subr.mxu0 0.0
    %178 = vmatpush1.msra.mxu0 0.0
    %179 = vmatprep.subr.mxu0 0.0
    %180 = vmatpush1.msra.mxu0 0.0
    %181 = vmatprep.subr.mxu0 0.0
    %182 = vmatpush1.msra.mxu0 0.0
    %183 = vmatprep.subr.mxu0 0.0
    %184 = vmatpush1.msra.mxu0 0.0
    %185 = vmatprep.subr.mxu0 0.0
    %186 = vmatpush1.msra.mxu0 0.0
    %187 = vmatprep.subr.mxu0 0.0
    %188 = vmatpush1.msra.mxu0 0.0
    %189 = vmatprep.subr.mxu0 0.0
    %190 = vmatpush1.msra.mxu0 0.0
    %191 = vmatprep.mubr.f32.mxu0 0.0
    %192 = vmatmul.mubr.f32.gmra.mrb[0].mxu0 %v125
    %v193 = vpop.f32.mrb[0].mxu0
    %v194 = vadd.f32 %v121, %v193
    %v195 = vpop.f32.mrb[0].mxu0
    %196 = vdwg.mxu0
    %vm197 = vcmask 64512
    %198 = vst.msk [vmem:[#allocation2] sm:$0xff] %vm197, %v194
    // Predicated region
    $region22: #{tpu_custom_call.1} parent=1 // pred_check
      _
    $region23: #{tpu_custom_call.1} parent=1 // pred_check_branch
      %200 = sbr.rel (0) target = $region25
    $region24: #{tpu_custom_call.1} parent=1 // pred_region
      %s202 = ssub.s32 128, 32
      %203 = vsyncadd [#allocation3], %s202
      %s204 = sshll.u32 [#allocation2], 4
      %s205 = int_to_ptr.vmem [resolvable:$true] %s204
      %210 = dma.vmem_to_hbm [thread:$0]  %s205, 32, %s5, [#allocation3], 32, 32, 2
    $region25: #{tpu_custom_call.1} parent=1 // pred_fallthru
      _
    // Predicated region
    $region26: #{tpu_custom_call.1} parent=1 // pred_check
      _
    $region27: #{tpu_custom_call.1} parent=1 // pred_check_branch
      %212 = sbr.rel (0) target = $region29
    $region28: #{tpu_custom_call.1} parent=1 // pred_region
      %213 = dma.done [#allocation3], 128
    $region29: #{tpu_custom_call.1} parent=1 // pred_fallthru
      _
    %214 = vsyncpa [#allocation3], 1

</llo_original>
